<compile_context>
chip_gen: v7x
topology: tpu7x:2x2x1
jax: 0.10.0
libtpu: 0.0.40
codegen_flags: <defaults>
</compile_context>

<pallas_src>
import functools

import jax
import jax.numpy as jnp
from jax import lax
from jax.experimental import pallas as pl
from jax.experimental.pallas import tpu as pltpu

NUM_BLOCKS_VIS = 4
S1_HIDDEN = 128
S2_H = NUM_BLOCKS_VIS + 1                  # 5
S2_W = 2 * NUM_BLOCKS_VIS + 1              # 9
CCH = 3                                    # conv out channels
CONV_OUT_H = S2_H - 2                      # 3
CONV_OUT_W = S2_W - 2                      # 7
S2_FLAT = S2_H * S2_W                      # 45
CONV_FLAT = CONV_OUT_H * CONV_OUT_W * CCH  # 63
IN_CAT = S2_FLAT + 4                       # 49  (vis_flat | compass)
FUSE_OUT = S1_HIDDEN + S2_FLAT             # 173 (s1_layer1 | s2_pre)
OUT_DIM = 3
OUT_PAD = 128                              # lane-dense output slab width


def qnet_kernel(xin_ref,
                wc_ref, bc_ref,
                w2_ref, b2_ref,
                w31a_ref, w31b_ref, b31_ref,
                w32_ref, b32_ref, w33_ref, b33_ref,
                out_ref):
    f32 = jnp.float32
    bf16 = jnp.bfloat16

    xin = xin_ref[...]                                   # f32 (TB, 49)

    # ---- fused first stage: [S1_linear_1 | folded S2 conv chain] ----
    z = jnp.maximum(
        jnp.dot(xin.astype(bf16), wc_ref[...], preferred_element_type=f32)
        + bc_ref[...], 0.0)                              # (TB, 173)
    s1 = z[:, :S1_HIDDEN]                                # lane tile 0
    s2 = z[:, S1_HIDDEN:] + xin[:, :S2_FLAT]             # residual, f32 exact
    # TODO(synk): Dropout(p=0.1) on S1/S2 implemented as eval-mode identity.

    # ---- S1 second layer: Linear(128,128) + ReLU ----
    s1 = jnp.maximum(
        jnp.dot(s1.astype(bf16), w2_ref[...], preferred_element_type=f32)
        + b2_ref[...], 0.0)

    # ---- S3 head: cat(S1, S2) @ W realised as split-weight matmuls ----
    s3 = jnp.maximum(
        jnp.dot(s1.astype(bf16), w31a_ref[...], preferred_element_type=f32)
        + jnp.dot(s2.astype(bf16), w31b_ref[...], preferred_element_type=f32)
        + b31_ref[...], 0.0)
    s3 = jnp.maximum(
        jnp.dot(s3.astype(bf16), w32_ref[...], preferred_element_type=f32)
        + b32_ref[...], 0.0)
    out_ref[...] = (
        jnp.dot(s3.astype(bf16), w33_ref[...], preferred_element_type=f32)
        + b33_ref[...])


def _round_up(x, m):
    return (x + m - 1) // m * m


def prepare_params(params):
    """One-time glue: fold the affine conv1->conv2->S2_linear chain into an
    exact (45,45)/(1,45) map, merge it with S1_linear_1 into one
    block-diagonal (49,173) weight, cast matmul weights to bf16 (f32
    accumulate in-kernel), and pad the final layer to a lane-dense 128-wide
    output slab."""
    dn = ("NCHW", "OIHW", "NCHW")

    def s2_affine(flat):                                 # (N,45) -> (N,45)
        x = flat.reshape(-1, 1, S2_H, S2_W)
        c1 = lax.conv_general_dilated(x, params["c1w"], (1, 1), "VALID",
                                      dimension_numbers=dn)
        c1 = c1 + params["c1b"][None, :, None, None]
        c2 = lax.conv_general_dilated(c1, params["c2w"], (1, 1), "VALID",
                                      dimension_numbers=dn)
        c2 = c2 + params["c2b"][None, :, None, None]
        return c2.reshape(flat.shape[0], -1) @ params["wr"] + params["s2b"]

    b_eff = s2_affine(jnp.zeros((1, S2_FLAT), jnp.float32))            # (1,45)
    w_eff = s2_affine(jnp.eye(S2_FLAT, dtype=jnp.float32)) - b_eff     # (45,45)

    # Block-diagonal fused first-stage weight: rows 0:45 (vis) -> cols 128:173,
    # rows 45:49 (compass) -> cols 0:128.  Zero cross-blocks keep it exact.
    wc = jnp.zeros((IN_CAT, FUSE_OUT), jnp.float32)
    wc = wc.at[:S2_FLAT, S1_HIDDEN:].set(w_eff)
    wc = wc.at[S2_FLAT:, :S1_HIDDEN].set(params["w1"])
    bc = jnp.concatenate([params["b1"], b_eff], axis=1)                # (1,173)

    bf16 = jnp.bfloat16
    w33p = jnp.pad(params["w33"], ((0, 0), (0, OUT_PAD - OUT_DIM)))
    b33p = jnp.pad(params["b33"], ((0, 0), (0, OUT_PAD - OUT_DIM)))
    return {
        "wc": wc.astype(bf16), "bc": bc,
        "w2": params["w2"].astype(bf16), "b2": params["b2"],
        "w31a": params["w31a"].astype(bf16),
        "w31b": params["w31b"].astype(bf16), "b31": params["b31"],
        "w32": params["w32"].astype(bf16), "b32": params["b32"],
        "w33": w33p.astype(bf16), "b33": b33p,
    }


@functools.partial(jax.jit, static_argnames=("block_b",))
def qnet_forward(prep, compass, vis, *, block_b=512):
    B = compass.shape[0]
    vis_flat = vis.reshape(B, -1)                        # matches .view(b, -1)
    xin = jnp.concatenate([vis_flat, compass], axis=1)   # (B, 49)

    tb = min(block_b, _round_up(B, 8))                   # sublane-aligned tile
    bp = _round_up(B, tb)
    if bp != B:                                          # pad the tail tile
        xin = jnp.pad(xin, ((0, bp - B), (0, 0)))

    act = lambda cols: pl.BlockSpec((tb, cols), lambda i: (i, 0))
    res = lambda shape: pl.BlockSpec(shape, lambda i: (0, 0))   # VMEM-resident

    out = pl.pallas_call(
        qnet_kernel,
        out_shape=jax.ShapeDtypeStruct((bp, OUT_PAD), jnp.float32),
        grid=(bp // tb,),
        in_specs=[
            act(IN_CAT),
            res((IN_CAT, FUSE_OUT)), res((1, FUSE_OUT)),
            res((S1_HIDDEN, S1_HIDDEN)), res((1, S1_HIDDEN)),
            res((S1_HIDDEN, 80)), res((S2_FLAT, 80)), res((1, 80)),
            res((80, 30)), res((1, 30)),
            res((30, OUT_PAD)), res((1, OUT_PAD)),
        ],
        out_specs=act(OUT_PAD),
        compiler_params=pltpu.CompilerParams(
            dimension_semantics=("parallel",)),
    )(xin,
      prep["wc"], prep["bc"],
      prep["w2"], prep["b2"],
      prep["w31a"], prep["w31b"], prep["b31"],
      prep["w32"], prep["b32"], prep["w33"], prep["b33"])
    return out[:B, :OUT_DIM]


def init_params(key):
    ks = jax.random.split(key, 17)

    def u(k, shape, fan_in):
        bound = 1.0 / (fan_in ** 0.5)
        return jax.random.uniform(k, shape, jnp.float32, -bound, bound)

    p = {}
    p["w1"] = u(ks[0], (4, S1_HIDDEN), 4)
    p["b1"] = u(ks[1], (1, S1_HIDDEN), 4)
    p["w2"] = u(ks[2], (S1_HIDDEN, S1_HIDDEN), S1_HIDDEN)
    p["b2"] = u(ks[3], (1, S1_HIDDEN), S1_HIDDEN)
    p["c1w"] = u(ks[4], (CCH, 1, 2, 2), 1 * 2 * 2)
    p["c1b"] = u(ks[5], (CCH,), 1 * 2 * 2)
    p["c2w"] = u(ks[6], (CCH, CCH, 2, 2), CCH * 2 * 2)
    p["c2b"] = u(ks[7], (CCH,), CCH * 2 * 2)
    p["wr"] = u(ks[8], (CONV_FLAT, S2_FLAT), CONV_FLAT)     # (in, out)
    p["s2b"] = u(ks[9], (1, S2_FLAT), CONV_FLAT)
    p["w31a"] = u(ks[10], (S1_HIDDEN, 80), S1_HIDDEN + S2_FLAT)
    p["w31b"] = u(ks[11], (S2_FLAT, 80), S1_HIDDEN + S2_FLAT)
    p["b31"] = u(ks[12], (1, 80), S1_HIDDEN + S2_FLAT)
    p["w32"] = u(ks[13], (80, 30), 80)
    p["b32"] = u(ks[14], (1, 30), 80)
    p["w33"] = u(ks[15], (30, OUT_DIM), 30)
    p["b33"] = u(ks[16], (1, OUT_DIM), 30)
    return p


def qnet_ref(params, compass, vis):
    """Pure-JAX f32 reference mirroring the PyTorch forward (eval mode)."""
    B = compass.shape[0]
    s1 = jax.nn.relu(compass @ params["w1"] + params["b1"])
    s1 = jax.nn.relu(s1 @ params["w2"] + params["b2"])
    dn = ("NCHW", "OIHW", "NCHW")
    x = vis[:, None, :, :]
    c1 = lax.conv_general_dilated(x, params["c1w"], (1, 1), "VALID",
                                  dimension_numbers=dn)
    c1 = c1 + params["c1b"][None, :, None, None]
    c2 = lax.conv_general_dilated(c1, params["c2w"], (1, 1), "VALID",
                                  dimension_numbers=dn)
    c2 = c2 + params["c2b"][None, :, None, None]
    s2 = jax.nn.relu(c2.reshape(B, -1) @ params["wr"] + params["s2b"])
    s2 = s2 + vis.reshape(B, -1)
    s3 = jax.nn.relu(s1 @ params["w31a"] + s2 @ params["w31b"] + params["b31"])
    s3 = jax.nn.relu(s3 @ params["w32"] + params["b32"])
    return s3 @ params["w33"] + params["b33"]


if __name__ == "__main__":
    key = jax.random.PRNGKey(0)
    pk, ck, vk = jax.random.split(key, 3)
    params = init_params(pk)
    prep = prepare_params(params)

    B = 2
    compass = jax.random.normal(ck, (B, 4), jnp.float32)
    vis = jax.random.normal(vk, (B, S2_H, S2_W), jnp.float32)

    out = qnet_forward(prep, compass, vis)
    out = jax.block_until_ready(out)

    ref = qnet_ref(params, compass, vis)
    assert out.shape == (B, OUT_DIM), out.shape
    # bf16 matmul operands (f32 accumulate) -> slightly looser tolerance.
    assert jnp.allclose(out, ref, rtol=3e-2, atol=3e-2), (out, ref)
    print("KERNEL_OK")
</pallas_src>

<mosaic_0001>
module attributes {stable_mosaic.version = 11 : i64} {
  func.func @qnet_kernel(%arg0: i32, %arg1: memref<8x49xf32, #tpu.memory_space<vmem>>, %arg2: memref<49x173xbf16, #tpu.memory_space<vmem>>, %arg3: memref<1x173xf32, #tpu.memory_space<vmem>>, %arg4: memref<128x128xbf16, #tpu.memory_space<vmem>>, %arg5: memref<1x128xf32, #tpu.memory_space<vmem>>, %arg6: memref<128x80xbf16, #tpu.memory_space<vmem>>, %arg7: memref<45x80xbf16, #tpu.memory_space<vmem>>, %arg8: memref<1x80xf32, #tpu.memory_space<vmem>>, %arg9: memref<80x30xbf16, #tpu.memory_space<vmem>>, %arg10: memref<1x30xf32, #tpu.memory_space<vmem>>, %arg11: memref<30x128xbf16, #tpu.memory_space<vmem>>, %arg12: memref<1x128xf32, #tpu.memory_space<vmem>>, %arg13: memref<8x128xf32, #tpu.memory_space<vmem>>) attributes {dimension_semantics = [#tpu.dimension_semantics<parallel>], iteration_bounds = array<i64: 1>, scalar_prefetch = 0 : i64, scratch_operands = 0 : i64, tpu.core_type = #tpu.core_type<tc>, window_params = [{transform_indices = @transform_0, window_bounds = array<i64: 8, 49>}, {pipeline_mode = #tpu.pipeline_mode<synchronous>, transform_indices = @transform_1, window_bounds = array<i64: 49, 173>}, {pipeline_mode = #tpu.pipeline_mode<synchronous>, transform_indices = @transform_2, window_bounds = array<i64: 1, 173>}, {pipeline_mode = #tpu.pipeline_mode<synchronous>, transform_indices = @transform_3, window_bounds = array<i64: 128, 128>}, {pipeline_mode = #tpu.pipeline_mode<synchronous>, transform_indices = @transform_4, window_bounds = array<i64: 1, 128>}, {pipeline_mode = #tpu.pipeline_mode<synchronous>, transform_indices = @transform_5, window_bounds = array<i64: 128, 80>}, {pipeline_mode = #tpu.pipeline_mode<synchronous>, transform_indices = @transform_6, window_bounds = array<i64: 45, 80>}, {pipeline_mode = #tpu.pipeline_mode<synchronous>, transform_indices = @transform_7, window_bounds = array<i64: 1, 80>}, {pipeline_mode = #tpu.pipeline_mode<synchronous>, transform_indices = @transform_8, window_bounds = array<i64: 80, 30>}, {pipeline_mode = #tpu.pipeline_mode<synchronous>, transform_indices = @transform_9, window_bounds = array<i64: 1, 30>}, {pipeline_mode = #tpu.pipeline_mode<synchronous>, transform_indices = @transform_10, window_bounds = array<i64: 30, 128>}, {pipeline_mode = #tpu.pipeline_mode<synchronous>, transform_indices = @transform_11, window_bounds = array<i64: 1, 128>}, {transform_indices = @transform_12, window_bounds = array<i64: 8, 128>}]} {
    %c0 = arith.constant 0 : index
    %c0_0 = arith.constant 0 : index
    %0 = vector.load %arg1[%c0, %c0_0] : memref<8x49xf32, #tpu.memory_space<vmem>>, vector<8x49xf32>
    %1 = arith.truncf %0 : vector<8x49xf32> to vector<8x49xbf16>
    %c0_1 = arith.constant 0 : index
    %c0_2 = arith.constant 0 : index
    %2 = vector.load %arg2[%c0_1, %c0_2] : memref<49x173xbf16, #tpu.memory_space<vmem>>, vector<49x173xbf16>
    %cst = arith.constant dense<0.000000e+00> : vector<8x173xf32>
    %3 = tpu.matmul %1, %2, %cst {dimension_numbers = #tpu.dot_dimension_numbers<[1], [0], [0], [1], [0, 0, 1, 1], [], []>} : vector<8x49xbf16>, vector<49x173xbf16>, vector<8x173xf32> -> vector<8x173xf32>
    %c0_3 = arith.constant 0 : index
    %c0_4 = arith.constant 0 : index
    %4 = vector.load %arg3[%c0_3, %c0_4] : memref<1x173xf32, #tpu.memory_space<vmem>>, vector<1x173xf32>
    %5 = vector.broadcast %4 : vector<1x173xf32> to vector<8x173xf32>
    %6 = arith.addf %3, %5 : vector<8x173xf32>
    %cst_5 = arith.constant 0.000000e+00 : f32
    %7 = vector.broadcast %cst_5 : f32 to vector<8x173xf32>
    %8 = arith.maximumf %6, %7 : vector<8x173xf32>
    %9 = vector.extract_strided_slice %8 {offsets = [0, 0], sizes = [8, 128], strides = [1, 1]} : vector<8x173xf32> to vector<8x128xf32>
    %10 = vector.extract_strided_slice %8 {offsets = [0, 128], sizes = [8, 45], strides = [1, 1]} : vector<8x173xf32> to vector<8x45xf32>
    %11 = vector.extract_strided_slice %0 {offsets = [0, 0], sizes = [8, 45], strides = [1, 1]} : vector<8x49xf32> to vector<8x45xf32>
    %12 = arith.addf %10, %11 : vector<8x45xf32>
    %13 = arith.truncf %9 : vector<8x128xf32> to vector<8x128xbf16>
    %c0_6 = arith.constant 0 : index
    %c0_7 = arith.constant 0 : index
    %14 = vector.load %arg4[%c0_6, %c0_7] : memref<128x128xbf16, #tpu.memory_space<vmem>>, vector<128x128xbf16>
    %cst_8 = arith.constant dense<0.000000e+00> : vector<8x128xf32>
    %15 = tpu.matmul %13, %14, %cst_8 {dimension_numbers = #tpu.dot_dimension_numbers<[1], [0], [0], [1], [0, 0, 1, 1], [], []>} : vector<8x128xbf16>, vector<128x128xbf16>, vector<8x128xf32> -> vector<8x128xf32>
    %c0_9 = arith.constant 0 : index
    %c0_10 = arith.constant 0 : index
    %16 = vector.load %arg5[%c0_9, %c0_10] : memref<1x128xf32, #tpu.memory_space<vmem>>, vector<1x128xf32>
    %17 = vector.broadcast %16 : vector<1x128xf32> to vector<8x128xf32>
    %18 = arith.addf %15, %17 : vector<8x128xf32>
    %cst_11 = arith.constant 0.000000e+00 : f32
    %19 = vector.broadcast %cst_11 : f32 to vector<8x128xf32>
    %20 = arith.maximumf %18, %19 : vector<8x128xf32>
    %21 = arith.truncf %20 : vector<8x128xf32> to vector<8x128xbf16>
    %c0_12 = arith.constant 0 : index
    %c0_13 = arith.constant 0 : index
    %22 = vector.load %arg6[%c0_12, %c0_13] : memref<128x80xbf16, #tpu.memory_space<vmem>>, vector<128x80xbf16>
    %cst_14 = arith.constant dense<0.000000e+00> : vector<8x80xf32>
    %23 = tpu.matmul %21, %22, %cst_14 {dimension_numbers = #tpu.dot_dimension_numbers<[1], [0], [0], [1], [0, 0, 1, 1], [], []>} : vector<8x128xbf16>, vector<128x80xbf16>, vector<8x80xf32> -> vector<8x80xf32>
    %24 = arith.truncf %12 : vector<8x45xf32> to vector<8x45xbf16>
    %c0_15 = arith.constant 0 : index
    %c0_16 = arith.constant 0 : index
    %25 = vector.load %arg7[%c0_15, %c0_16] : memref<45x80xbf16, #tpu.memory_space<vmem>>, vector<45x80xbf16>
    %cst_17 = arith.constant dense<0.000000e+00> : vector<8x80xf32>
    %26 = tpu.matmul %24, %25, %cst_17 {dimension_numbers = #tpu.dot_dimension_numbers<[1], [0], [0], [1], [0, 0, 1, 1], [], []>} : vector<8x45xbf16>, vector<45x80xbf16>, vector<8x80xf32> -> vector<8x80xf32>
    %27 = arith.addf %23, %26 : vector<8x80xf32>
    %c0_18 = arith.constant 0 : index
    %c0_19 = arith.constant 0 : index
    %28 = vector.load %arg8[%c0_18, %c0_19] : memref<1x80xf32, #tpu.memory_space<vmem>>, vector<1x80xf32>
    %29 = vector.broadcast %28 : vector<1x80xf32> to vector<8x80xf32>
    %30 = arith.addf %27, %29 : vector<8x80xf32>
    %cst_20 = arith.constant 0.000000e+00 : f32
    %31 = vector.broadcast %cst_20 : f32 to vector<8x80xf32>
    %32 = arith.maximumf %30, %31 : vector<8x80xf32>
    %33 = arith.truncf %32 : vector<8x80xf32> to vector<8x80xbf16>
    %c0_21 = arith.constant 0 : index
    %c0_22 = arith.constant 0 : index
    %34 = vector.load %arg9[%c0_21, %c0_22] : memref<80x30xbf16, #tpu.memory_space<vmem>>, vector<80x30xbf16>
    %cst_23 = arith.constant dense<0.000000e+00> : vector<8x30xf32>
    %35 = tpu.matmul %33, %34, %cst_23 {dimension_numbers = #tpu.dot_dimension_numbers<[1], [0], [0], [1], [0, 0, 1, 1], [], []>} : vector<8x80xbf16>, vector<80x30xbf16>, vector<8x30xf32> -> vector<8x30xf32>
    %c0_24 = arith.constant 0 : index
    %c0_25 = arith.constant 0 : index
    %36 = vector.load %arg10[%c0_24, %c0_25] : memref<1x30xf32, #tpu.memory_space<vmem>>, vector<1x30xf32>
    %37 = vector.broadcast %36 : vector<1x30xf32> to vector<8x30xf32>
    %38 = arith.addf %35, %37 : vector<8x30xf32>
    %cst_26 = arith.constant 0.000000e+00 : f32
    %39 = vector.broadcast %cst_26 : f32 to vector<8x30xf32>
    %40 = arith.maximumf %38, %39 : vector<8x30xf32>
    %41 = arith.truncf %40 : vector<8x30xf32> to vector<8x30xbf16>
    %c0_27 = arith.constant 0 : index
    %c0_28 = arith.constant 0 : index
    %42 = vector.load %arg11[%c0_27, %c0_28] : memref<30x128xbf16, #tpu.memory_space<vmem>>, vector<30x128xbf16>
    %cst_29 = arith.constant dense<0.000000e+00> : vector<8x128xf32>
    %43 = tpu.matmul %41, %42, %cst_29 {dimension_numbers = #tpu.dot_dimension_numbers<[1], [0], [0], [1], [0, 0, 1, 1], [], []>} : vector<8x30xbf16>, vector<30x128xbf16>, vector<8x128xf32> -> vector<8x128xf32>
    %c0_30 = arith.constant 0 : index
    %c0_31 = arith.constant 0 : index
    %44 = vector.load %arg12[%c0_30, %c0_31] : memref<1x128xf32, #tpu.memory_space<vmem>>, vector<1x128xf32>
    %45 = vector.broadcast %44 : vector<1x128xf32> to vector<8x128xf32>
    %46 = arith.addf %43, %45 : vector<8x128xf32>
    %c0_32 = arith.constant 0 : index
    %c0_33 = arith.constant 0 : index
    %47 = vector.load %arg13[%c0_32, %c0_33] : memref<8x128xf32, #tpu.memory_space<vmem>>, vector<8x128xf32>
    tpu.vector_store %arg13[%c0_32, %c0_33], %46 {strides = array<i32>} : memref<8x128xf32, #tpu.memory_space<vmem>>, vector<8x128xf32>,
    return
  }
  func.func @transform_0(%arg0: i32) -> (i32, i32) {
    %c0_i32 = arith.constant 0 : i32
    %c0_i32_0 = arith.constant 0 : i32
    return %arg0, %c0_i32 : i32, i32
  }
  func.func @transform_1(%arg0: i32) -> (i32, i32) {
    %c0_i32 = arith.constant 0 : i32
    %c0_i32_0 = arith.constant 0 : i32
    %c0_i32_1 = arith.constant 0 : i32
    return %c0_i32, %c0_i32_0 : i32, i32
  }
  func.func @transform_2(%arg0: i32) -> (i32, i32) {
    %c0_i32 = arith.constant 0 : i32
    %c0_i32_0 = arith.constant 0 : i32
    %c0_i32_1 = arith.constant 0 : i32
    return %c0_i32, %c0_i32_0 : i32, i32
  }
  func.func @transform_3(%arg0: i32) -> (i32, i32) {
    %c0_i32 = arith.constant 0 : i32
    %c0_i32_0 = arith.constant 0 : i32
    %c0_i32_1 = arith.constant 0 : i32
    return %c0_i32, %c0_i32_0 : i32, i32
  }
  func.func @transform_4(%arg0: i32) -> (i32, i32) {
    %c0_i32 = arith.constant 0 : i32
    %c0_i32_0 = arith.constant 0 : i32
    %c0_i32_1 = arith.constant 0 : i32
    return %c0_i32, %c0_i32_0 : i32, i32
  }
  func.func @transform_5(%arg0: i32) -> (i32, i32) {
    %c0_i32 = arith.constant 0 : i32
    %c0_i32_0 = arith.constant 0 : i32
    %c0_i32_1 = arith.constant 0 : i32
    return %c0_i32, %c0_i32_0 : i32, i32
  }
  func.func @transform_6(%arg0: i32) -> (i32, i32) {
    %c0_i32 = arith.constant 0 : i32
    %c0_i32_0 = arith.constant 0 : i32
    %c0_i32_1 = arith.constant 0 : i32
    return %c0_i32, %c0_i32_0 : i32, i32
  }
  func.func @transform_7(%arg0: i32) -> (i32, i32) {
    %c0_i32 = arith.constant 0 : i32
    %c0_i32_0 = arith.constant 0 : i32
    %c0_i32_1 = arith.constant 0 : i32
    return %c0_i32, %c0_i32_0 : i32, i32
  }
  func.func @transform_8(%arg0: i32) -> (i32, i32) {
    %c0_i32 = arith.constant 0 : i32
    %c0_i32_0 = arith.constant 0 : i32
    %c0_i32_1 = arith.constant 0 : i32
    return %c0_i32, %c0_i32_0 : i32, i32
  }
  func.func @transform_9(%arg0: i32) -> (i32, i32) {
    %c0_i32 = arith.constant 0 : i32
    %c0_i32_0 = arith.constant 0 : i32
    %c0_i32_1 = arith.constant 0 : i32
    return %c0_i32, %c0_i32_0 : i32, i32
  }
  func.func @transform_10(%arg0: i32) -> (i32, i32) {
    %c0_i32 = arith.constant 0 : i32
    %c0_i32_0 = arith.constant 0 : i32
    %c0_i32_1 = arith.constant 0 : i32
    return %c0_i32, %c0_i32_0 : i32, i32
  }
  func.func @transform_11(%arg0: i32) -> (i32, i32) {
    %c0_i32 = arith.constant 0 : i32
    %c0_i32_0 = arith.constant 0 : i32
    %c0_i32_1 = arith.constant 0 : i32
    return %c0_i32, %c0_i32_0 : i32, i32
  }
  func.func @transform_12(%arg0: i32) -> (i32, i32) {
    %c0_i32 = arith.constant 0 : i32
    %c0_i32_0 = arith.constant 0 : i32
    return %arg0, %c0_i32 : i32, i32
  }
}

</mosaic_0001>

<llo_original>
// kernel: qnet_forward.1
$region0: #{qnet_forward.1}
  #allocation0 [shape = 'u32[]', space=smem, size = 0x4, offset = 0x4, fixed_abs, tag = 'smem constant byte address 0x4 - core index']
  #allocation1 [shape = 'u32[144,128]{1,0:T(1,128)}', space=vmem, size = 0x12000, scoped, tag = 'internal scratch']
  %s0 = inlined_call_operand.vmem [shape: f32[8,49], index: 0, kind: input, shape index: {}]
  %s1 = inlined_call_operand.vmem [shape: bf16[49,173], index: 1, kind: input, shape index: {}]
  %s2 = inlined_call_operand.vmem [shape: f32[1,173], index: 2, kind: input, shape index: {}]
  %s3 = inlined_call_operand.vmem [shape: bf16[128,128], index: 3, kind: input, shape index: {}]
  %s4 = inlined_call_operand.hbm [shape: f32[1,128], index: 4, kind: input, shape index: {}]
  %s5 = inlined_call_operand.vmem [shape: bf16[128,80], index: 5, kind: input, shape index: {}]
  %s6 = inlined_call_operand.vmem [shape: bf16[45,80], index: 6, kind: input, shape index: {}]
  %s7 = inlined_call_operand.vmem [shape: f32[1,80], index: 7, kind: input, shape index: {}]
  %s8 = inlined_call_operand.vmem [shape: bf16[80,30], index: 8, kind: input, shape index: {}]
  %s9 = inlined_call_operand.vmem [shape: f32[1,30], index: 9, kind: input, shape index: {}]
  %s10 = inlined_call_operand.vmem [shape: bf16[30,128], index: 10, kind: input, shape index: {}]
  %s11 = inlined_call_operand.vmem [shape: f32[1,128], index: 11, kind: input, shape index: {}]
  %s12 = inlined_call_operand.vmem [shape: f32[8,128], index: 12, kind: output, shape index: {}]
  %s13 = sld [smem:[#allocation0]]
  $region62: #{qnet_forward.1} parent=0
    _
  %s15 = ssub.s32 1, %s13
  %s16 = scalar_select 0, %s15, %s13
  $region1: #{qnet_forward.1} parent=0
    #allocation2 [shape = 'u8[512]{0}', space=vmem, size = 0x400, scoped, tag = 'input window, operand 4, single buffered']
    #allocation3 [shape = 's32[1]{0}', space=sflag, size = 0x4, scoped, tag = 'scoped memory for qnet_forward.1']
    %17 = vsyncpa [#allocation3], 0
    // Predicated region
    $region2: #{qnet_forward.1} parent=1 // pred_check
      _
    $region3: #{qnet_forward.1} parent=1 // pred_check_branch
      %19 = sbr.rel (0) target = $region5
    $region4: #{qnet_forward.1} parent=1 // pred_region
      _
    $region5: #{qnet_forward.1} parent=1 // pred_fallthru
      _
    // Predicated region
    $region6: #{qnet_forward.1} parent=1 // pred_check
      _
    $region7: #{qnet_forward.1} parent=1 // pred_check_branch
      %21 = sbr.rel (0) target = $region9
    $region8: #{qnet_forward.1} parent=1 // pred_region
      _
    $region9: #{qnet_forward.1} parent=1 // pred_fallthru
      _
    // Predicated region
    $region10: #{qnet_forward.1} parent=1 // pred_check
      _
    $region11: #{qnet_forward.1} parent=1 // pred_check_branch
      %23 = sbr.rel (0) target = $region13
    $region12: #{qnet_forward.1} parent=1 // pred_region
      _
    $region13: #{qnet_forward.1} parent=1 // pred_fallthru
      _
    // Predicated region
    $region14: #{qnet_forward.1} parent=1 // pred_check
      _
    $region15: #{qnet_forward.1} parent=1 // pred_check_branch
      %25 = sbr.rel (0) target = $region17
    $region16: #{qnet_forward.1} parent=1 // pred_region
      _
    $region17: #{qnet_forward.1} parent=1 // pred_fallthru
      _
    // Predicated region
    $region18: #{qnet_forward.1} parent=1 // pred_check
      _
    $region19: #{qnet_forward.1} parent=1 // pred_check_branch
      %27 = sbr.rel (0) target = $region21
    $region20: #{qnet_forward.1} parent=1 // pred_region
      %s29 = ssub.s32 16, 16
      %30 = vsyncadd [#allocation3], %s29
      %s32 = sshll.u32 [#allocation2], 4
      %s33 = int_to_ptr.vmem [resolvable:$true] %s32
      %35 = dma.hbm_to_vmem [thread:$0]  %s4, 16, %s33, [#allocation3]
    $region21: #{qnet_forward.1} parent=1 // pred_fallthru
      _
    // Predicated region
    $region22: #{qnet_forward.1} parent=1 // pred_check
      _
    $region23: #{qnet_forward.1} parent=1 // pred_check_branch
      %37 = sbr.rel (0) target = $region25
    $region24: #{qnet_forward.1} parent=1 // pred_region
      _
    $region25: #{qnet_forward.1} parent=1 // pred_fallthru
      _
    // Predicated region
    $region26: #{qnet_forward.1} parent=1 // pred_check
      _
    $region27: #{qnet_forward.1} parent=1 // pred_check_branch
      %39 = sbr.rel (0) target = $region29
    $region28: #{qnet_forward.1} parent=1 // pred_region
      _
    $region29: #{qnet_forward.1} parent=1 // pred_fallthru
      _
    // Predicated region
    $region30: #{qnet_forward.1} parent=1 // pred_check
      _
    $region31: #{qnet_forward.1} parent=1 // pred_check_branch
      %41 = sbr.rel (0) target = $region33
    $region32: #{qnet_forward.1} parent=1 // pred_region
      _
    $region33: #{qnet_forward.1} parent=1 // pred_fallthru
      _
    // Predicated region
    $region34: #{qnet_forward.1} parent=1 // pred_check
      _
    $region35: #{qnet_forward.1} parent=1 // pred_check_branch
      %43 = sbr.rel (0) target = $region37
    $region36: #{qnet_forward.1} parent=1 // pred_region
      _
    $region37: #{qnet_forward.1} parent=1 // pred_fallthru
      _
    // Predicated region
    $region38: #{qnet_forward.1} parent=1 // pred_check
      _
    $region39: #{qnet_forward.1} parent=1 // pred_check_branch
      %45 = sbr.rel (0) target = $region41
    $region40: #{qnet_forward.1} parent=1 // pred_region
      _
    $region41: #{qnet_forward.1} parent=1 // pred_fallthru
      _
    // Predicated region
    $region42: #{qnet_forward.1} parent=1 // pred_check
      _
    $region43: #{qnet_forward.1} parent=1 // pred_check_branch
      %47 = sbr.rel (0) target = $region45
    $region44: #{qnet_forward.1} parent=1 // pred_region
      _
    $region45: #{qnet_forward.1} parent=1 // pred_fallthru
      _
    // Predicated region
    $region46: #{qnet_forward.1} parent=1 // pred_check
      _
    $region47: #{qnet_forward.1} parent=1 // pred_check_branch
      %49 = sbr.rel (0) target = $region49
    $region48: #{qnet_forward.1} parent=1 // pred_region
      _
    $region49: #{qnet_forward.1} parent=1 // pred_fallthru
      _
    // Predicated region
    $region50: #{qnet_forward.1} parent=1 // pred_check
      _
    $region51: #{qnet_forward.1} parent=1 // pred_check_branch
      %51 = sbr.rel (0) target = $region53
    $region52: #{qnet_forward.1} parent=1 // pred_region
      %52 = dma.done [#allocation3], 16
    $region53: #{qnet_forward.1} parent=1 // pred_fallthru
      _
    %v54 = vld [vmem:[%s0] sm:$0xff]
    %v55 = vpack.c.bf16 %v54, %v54
    %v56 = vld [vmem:[%s1] sm:$0xff]
    %v57 = vld [vmem:[%s1 + $0x8] sm:$0xff]
    %v58 = vld [vmem:[%s1 + $0x10] sm:$0xff]
    %v59 = vld [vmem:[%s1 + $0x18] sm:$0xff]
    %v60 = vld [vmem:[%s1 + $0x20] sm:$0xff]
    %v61 = vld [vmem:[%s1 + $0x28] sm:$0xff]
    %v62 = vld [vmem:[%s1 + $0x30] sm:$0x11]
    %v63 = vld [vmem:[%s2] sm:$0x3]
    %v65 = vlaneseq
    %v66 = vshrl.u32 %v65, 7
    %v67 = vsub.s32 0, %v66
    %v68 = vrot.slane %v63, %v67
    %v69 = vlaneseq
    %v70 = vshrl.u32 %v69, 7
    %v71 = vsub.s32 1, %v70
    %v72 = vrot.slane %v63, %v71
    %v82 = vunpack.c.l.b16 %v56
    %v83 = vunpack.c.h.b16 %v56
    %v84 = vunpack.c.l.b16 %v57
    %v85 = vunpack.c.h.b16 %v57
    %v86 = vunpack.c.l.b16 %v58
    %v87 = vunpack.c.h.b16 %v58
    %v88 = vunpack.c.l.b16 %v59
    %v89 = vunpack.c.h.b16 %v59
    %v90 = vunpack.c.l.b16 %v60
    %v91 = vunpack.c.h.b16 %v60
    %v92 = vunpack.c.l.b16 %v61
    %v93 = vunpack.c.h.b16 %v61
    %v94 = vunpack.c.l.b16 %v62
    %v95 = vunpack.c.h.b16 %v62
    %v96 = vpack.c.b16 %v84, %v82
    %v97 = vpack.c.b16 %v85, %v83
    %v98 = vpack.c.b16 %v88, %v86
    %v99 = vpack.c.b16 %v89, %v87
    %v100 = vpack.c.b16 %v92, %v90
    %v101 = vpack.c.b16 %v93, %v91
    %v102 = vpack.c.b16 %v94, %v94
    %v103 = vpack.c.b16 %v95, %v95
    %vm110 = vcmask 400384
    %v112 = vsel %vm110, %v55, 0
    %vm114 = vcmask 1040384
    %v115 = vsel 0, 4294967295, 65535
    %v116 = vsel %vm114, %v115, 0
    %v118 = vand.u32 %v102, %v116
    %v121 = vand.u32 %v103, %v116
    %123 = vmatprep.subr.bf16.mxu0 %v97
    %124 = vmatpush1.bf16.msra.mxu0 %v96
    %125 = vmatprep.subr.bf16.mxu0 %v99
    %126 = vmatpush1.bf16.msra.mxu0 %v98
    %127 = vmatprep.subr.bf16.mxu0 %v101
    %128 = vmatpush1.bf16.msra.mxu0 %v100
    %129 = vmatprep.subr.bf16.mxu0 %v121
    %130 = vmatpush1.bf16.msra.mxu0 %v118
    %131 = vmatprep.subr.bf16.mxu0 0
    %132 = vmatpush1.bf16.msra.mxu0 0
    %133 = vmatprep.subr.bf16.mxu0 0
    %134 = vmatpush1.bf16.msra.mxu0 0
    %135 = vmatprep.subr.bf16.mxu0 0
    %136 = vmatpush1.bf16.msra.mxu0 0
    %137 = vmatprep.subr.bf16.mxu0 0
    %138 = vmatpush1.bf16.msra.mxu0 0
    %139 = vmatprep.subr.bf16.mxu0 0
    %140 = vmatpush1.bf16.msra.mxu0 0
    %141 = vmatprep.subr.bf16.mxu0 0
    %142 = vmatpush1.bf16.msra.mxu0 0
    %143 = vmatprep.subr.bf16.mxu0 0
    %144 = vmatpush1.bf16.msra.mxu0 0
    %145 = vmatprep.subr.bf16.mxu0 0
    %146 = vmatpush1.bf16.msra.mxu0 0
    %147 = vmatprep.subr.bf16.mxu0 0
    %148 = vmatpush1.bf16.msra.mxu0 0
    %149 = vmatprep.subr.bf16.mxu0 0
    %150 = vmatpush1.bf16.msra.mxu0 0
    %151 = vmatprep.subr.bf16.mxu0 0
    %152 = vmatpush1.bf16.msra.mxu0 0
    %153 = vmatprep.subr.bf16.mxu0 0
    %154 = vmatpush1.bf16.msra.mxu0 0
    %155 = vmatprep.mubr.bf16.mxu0 0
    %156 = vmatmul.mubr.bf16.gmra.mrb[0].mxu0 %v112
    %v157 = vpop.f32.mrb[0].mxu0
    %v158 = vadd.f32 %v68, %v157
    %v159 = vpop.f32.mrb[0].mxu0
    %v160 = vadd.f32 %v72, %v159
    %v161 = vpop.f32.mrb[0].mxu0
    %v162 = vpop.f32.mrb[0].mxu0
    %163 = vdwg.mxu0
    %v164 = vmax.f32 %v158, 0.0
    %v165 = vmax.f32 %v160, 0.0
    %v166 = vadd.f32 %v165, %v54
    %v167 = vpack.c.bf16 %v164, %v164
    %v168 = vld [vmem:[%s3] sm:$0xf]
    %v169 = vld [vmem:[%s3 + $0x4] sm:$0xf]
    %v170 = vld [vmem:[%s3 + $0x8] sm:$0xf]
    %v171 = vld [vmem:[%s3 + $0xc] sm:$0xf]
    %v172 = vld [vmem:[%s3 + $0x10] sm:$0xf]
    %v173 = vld [vmem:[%s3 + $0x14] sm:$0xf]
    %v174 = vld [vmem:[%s3 + $0x18] sm:$0xf]
    %v175 = vld [vmem:[%s3 + $0x1c] sm:$0xf]
    %v176 = vld [vmem:[%s3 + $0x20] sm:$0xf]
    %v177 = vld [vmem:[%s3 + $0x24] sm:$0xf]
    %v178 = vld [vmem:[%s3 + $0x28] sm:$0xf]
    %v179 = vld [vmem:[%s3 + $0x2c] sm:$0xf]
    %v180 = vld [vmem:[%s3 + $0x30] sm:$0xf]
    %v181 = vld [vmem:[%s3 + $0x34] sm:$0xf]
    %v182 = vld [vmem:[%s3 + $0x38] sm:$0xf]
    %v183 = vld [vmem:[%s3 + $0x3c] sm:$0xf]
    %v184 = vld [vmem:[#allocation2] sm:$0x1]
    %v186 = vlaneseq
    %v187 = vshrl.u32 %v186, 7
    %v188 = vsub.s32 0, %v187
    %v189 = vrot.slane %v184, %v188
    %v207 = vunpack.c.l.b16 %v168
    %v208 = vunpack.c.l.b16 %v169
    %v209 = vunpack.c.l.b16 %v170
    %v210 = vunpack.c.l.b16 %v171
    %v211 = vunpack.c.l.b16 %v172
    %v212 = vunpack.c.l.b16 %v173
    %v213 = vunpack.c.l.b16 %v174
    %v214 = vunpack.c.l.b16 %v175
    %v215 = vunpack.c.l.b16 %v176
    %v216 = vunpack.c.l.b16 %v177
    %v217 = vunpack.c.l.b16 %v178
    %v218 = vunpack.c.l.b16 %v179
    %v219 = vunpack.c.l.b16 %v180
    %v220 = vunpack.c.l.b16 %v181
    %v221 = vunpack.c.l.b16 %v182
    %v222 = vunpack.c.l.b16 %v183
    %v223 = vpack.c.b16 %v208, %v207
    %v224 = vpack.c.b16 %v210, %v209
    %v225 = vpack.c.b16 %v212, %v211
    %v226 = vpack.c.b16 %v214, %v213
    %v227 = vpack.c.b16 %v216, %v215
    %v228 = vpack.c.b16 %v218, %v217
    %v229 = vpack.c.b16 %v220, %v219
    %v230 = vpack.c.b16 %v222, %v221
    %239 = vmatprep.subr.bf16.mxu0 0
    %240 = vmatpush1.bf16.msra.mxu0 %v223
    %241 = vmatprep.subr.bf16.mxu0 0
    %242 = vmatpush1.bf16.msra.mxu0 %v224
    %243 = vmatprep.subr.bf16.mxu0 0
    %244 = vmatpush1.bf16.msra.mxu0 %v225
    %245 = vmatprep.subr.bf16.mxu0 0
    %246 = vmatpush1.bf16.msra.mxu0 %v226
    %247 = vmatprep.subr.bf16.mxu0 0
    %248 = vmatpush1.bf16.msra.mxu0 %v227
    %249 = vmatprep.subr.bf16.mxu0 0
    %250 = vmatpush1.bf16.msra.mxu0 %v228
    %251 = vmatprep.subr.bf16.mxu0 0
    %252 = vmatpush1.bf16.msra.mxu0 %v229
    %253 = vmatprep.subr.bf16.mxu0 0
    %254 = vmatpush1.bf16.msra.mxu0 %v230
    %255 = vmatprep.subr.bf16.mxu0 0
    %256 = vmatpush1.bf16.msra.mxu0 0
    %257 = vmatprep.subr.bf16.mxu0 0
    %258 = vmatpush1.bf16.msra.mxu0 0
    %259 = vmatprep.subr.bf16.mxu0 0
    %260 = vmatpush1.bf16.msra.mxu0 0
    %261 = vmatprep.subr.bf16.mxu0 0
    %262 = vmatpush1.bf16.msra.mxu0 0
    %263 = vmatprep.subr.bf16.mxu0 0
    %264 = vmatpush1.bf16.msra.mxu0 0
    %265 = vmatprep.subr.bf16.mxu0 0
    %266 = vmatpush1.bf16.msra.mxu0 0
    %267 = vmatprep.subr.bf16.mxu0 0
    %268 = vmatpush1.bf16.msra.mxu0 0
    %269 = vmatprep.subr.bf16.mxu0 0
    %270 = vmatpush1.bf16.msra.mxu0 0
    %271 = vmatprep.mubr.bf16.mxu0 0
    %272 = vmatmul.mubr.bf16.gmra.mrb[0].mxu0 %v167
    %v273 = vpop.f32.mrb[0].mxu0
    %v274 = vadd.f32 %v189, %v273
    %v275 = vpop.f32.mrb[0].mxu0
    %v276 = vpop.f32.mrb[0].mxu0
    %v277 = vpop.f32.mrb[0].mxu0
    %278 = vdwg.mxu0
    %v279 = vmax.f32 %v274, 0.0
    %v280 = vpack.c.bf16 %v279, %v279
    %v281 = vld [vmem:[%s5] sm:$0xf]
    %v282 = vld [vmem:[%s5 + $0x4] sm:$0xf]
    %v283 = vld [vmem:[%s5 + $0x8] sm:$0xf]
    %v284 = vld [vmem:[%s5 + $0xc] sm:$0xf]
    %v285 = vld [vmem:[%s5 + $0x10] sm:$0xf]
    %v286 = vld [vmem:[%s5 + $0x14] sm:$0xf]
    %v287 = vld [vmem:[%s5 + $0x18] sm:$0xf]
    %v288 = vld [vmem:[%s5 + $0x1c] sm:$0xf]
    %v289 = vld [vmem:[%s5 + $0x20] sm:$0xf]
    %v290 = vld [vmem:[%s5 + $0x24] sm:$0xf]
    %v291 = vld [vmem:[%s5 + $0x28] sm:$0xf]
    %v292 = vld [vmem:[%s5 + $0x2c] sm:$0xf]
    %v293 = vld [vmem:[%s5 + $0x30] sm:$0xf]
    %v294 = vld [vmem:[%s5 + $0x34] sm:$0xf]
    %v295 = vld [vmem:[%s5 + $0x38] sm:$0xf]
    %v296 = vld [vmem:[%s5 + $0x3c] sm:$0xf]
    %v297 = vpack.c.bf16 %v166, %v166
    %v298 = vld [vmem:[%s6] sm:$0xf]
    %v299 = vld [vmem:[%s6 + $0x4] sm:$0xf]
    %v300 = vld [vmem:[%s6 + $0x8] sm:$0xf]
    %v301 = vld [vmem:[%s6 + $0xc] sm:$0xf]
    %v302 = vld [vmem:[%s6 + $0x10] sm:$0xf]
    %v303 = vld [vmem:[%s6 + $0x14] sm:$0x7]
    %v310 = vunpack.c.l.b16 %v298
    %v311 = vunpack.c.l.b16 %v299
    %v312 = vunpack.c.l.b16 %v300
    %v313 = vunpack.c.l.b16 %v301
    %v314 = vunpack.c.l.b16 %v302
    %v315 = vunpack.c.l.b16 %v303
    %v316 = vpack.c.b16 %v311, %v310
    %v317 = vpack.c.b16 %v313, %v312
    %v318 = vpack.c.b16 %v315, %v314
    %vm321 = vcmask 367616
    %v323 = vsel %vm321, %v297, 0
    %vm325 = vcmask 1045504
    %vm326 = vcmask 1046528
    %v327 = vsel %vm325, 4294967295, 65535
    %v328 = vsel %vm326, %v327, 0
    %v330 = vand.u32 %v318, %v328
    %332 = vmatprep.subr.bf16.mxu0 0
    %333 = vmatpush1.bf16.msra.mxu0 %v316
    %334 = vmatprep.subr.bf16.mxu0 0
    %335 = vmatpush1.bf16.msra.mxu0 %v317
    %336 = vmatprep.subr.bf16.mxu0 0
    %337 = vmatpush1.bf16.msra.mxu0 %v330
    %338 = vmatprep.subr.bf16.mxu0 0
    %339 = vmatpush1.bf16.msra.mxu0 0
    %340 = vmatprep.subr.bf16.mxu0 0
    %341 = vmatpush1.bf16.msra.mxu0 0
    %342 = vmatprep.subr.bf16.mxu0 0
    %343 = vmatpush1.bf16.msra.mxu0 0
    %344 = vmatprep.subr.bf16.mxu0 0
    %345 = vmatpush1.bf16.msra.mxu0 0
    %346 = vmatprep.subr.bf16.mxu0 0
    %347 = vmatpush1.bf16.msra.mxu0 0
    %348 = vmatprep.subr.bf16.mxu0 0
    %349 = vmatpush1.bf16.msra.mxu0 0
    %350 = vmatprep.subr.bf16.mxu0 0
    %351 = vmatpush1.bf16.msra.mxu0 0
    %352 = vmatprep.subr.bf16.mxu0 0
    %353 = vmatpush1.bf16.msra.mxu0 0
    %354 = vmatprep.subr.bf16.mxu0 0
    %355 = vmatpush1.bf16.msra.mxu0 0
    %356 = vmatprep.subr.bf16.mxu0 0
    %357 = vmatpush1.bf16.msra.mxu0 0
    %358 = vmatprep.subr.bf16.mxu0 0
    %359 = vmatpush1.bf16.msra.mxu0 0
    %360 = vmatprep.subr.bf16.mxu0 0
    %361 = vmatpush1.bf16.msra.mxu0 0
    %362 = vmatprep.subr.bf16.mxu0 0
    %363 = vmatpush1.bf16.msra.mxu0 0
    %364 = vmatprep.mubr.bf16.mxu0 0
    %365 = vmatmul.mubr.bf16.gmra.mrb[0].mxu0 %v323
    %v366 = vpop.f32.mrb[0].mxu0
    %v367 = vadd.f32 0.0, %v366
    %v368 = vpop.f32.mrb[0].mxu0
    %v369 = vpop.f32.mrb[0].mxu0
    %v370 = vpop.f32.mrb[0].mxu0
    %371 = vdwg.mxu0
    %v388 = vunpack.c.l.b16 %v281
    %v389 = vunpack.c.l.b16 %v282
    %v390 = vunpack.c.l.b16 %v283
    %v391 = vunpack.c.l.b16 %v284
    %v392 = vunpack.c.l.b16 %v285
    %v393 = vunpack.c.l.b16 %v286
    %v394 = vunpack.c.l.b16 %v287
    %v395 = vunpack.c.l.b16 %v288
    %v396 = vunpack.c.l.b16 %v289
    %v397 = vunpack.c.l.b16 %v290
    %v398 = vunpack.c.l.b16 %v291
    %v399 = vunpack.c.l.b16 %v292
    %v400 = vunpack.c.l.b16 %v293
    %v401 = vunpack.c.l.b16 %v294
    %v402 = vunpack.c.l.b16 %v295
    %v403 = vunpack.c.l.b16 %v296
    %v404 = vpack.c.b16 %v389, %v388
    %v405 = vpack.c.b16 %v391, %v390
    %v406 = vpack.c.b16 %v393, %v392
    %v407 = vpack.c.b16 %v395, %v394
    %v408 = vpack.c.b16 %v397, %v396
    %v409 = vpack.c.b16 %v399, %v398
    %v410 = vpack.c.b16 %v401, %v400
    %v411 = vpack.c.b16 %v403, %v402
    %420 = vmatprep.subr.bf16.mxu0 0
    %421 = vmatpush1.bf16.msra.mxu0 %v404
    %422 = vmatprep.subr.bf16.mxu0 0
    %423 = vmatpush1.bf16.msra.mxu0 %v405
    %424 = vmatprep.subr.bf16.mxu0 0
    %425 = vmatpush1.bf16.msra.mxu0 %v406
    %426 = vmatprep.subr.bf16.mxu0 0
    %427 = vmatpush1.bf16.msra.mxu0 %v407
    %428 = vmatprep.subr.bf16.mxu0 0
    %429 = vmatpush1.bf16.msra.mxu0 %v408
    %430 = vmatprep.subr.bf16.mxu0 0
    %431 = vmatpush1.bf16.msra.mxu0 %v409
    %432 = vmatprep.subr.bf16.mxu0 0
    %433 = vmatpush1.bf16.msra.mxu0 %v410
    %434 = vmatprep.subr.bf16.mxu0 0
    %435 = vmatpush1.bf16.msra.mxu0 %v411
    %436 = vmatprep.subr.bf16.mxu0 0
    %437 = vmatpush1.bf16.msra.mxu0 0
    %438 = vmatprep.subr.bf16.mxu0 0
    %439 = vmatpush1.bf16.msra.mxu0 0
    %440 = vmatprep.subr.bf16.mxu0 0
    %441 = vmatpush1.bf16.msra.mxu0 0
    %442 = vmatprep.subr.bf16.mxu0 0
    %443 = vmatpush1.bf16.msra.mxu0 0
    %444 = vmatprep.subr.bf16.mxu0 0
    %445 = vmatpush1.bf16.msra.mxu0 0
    %446 = vmatprep.subr.bf16.mxu0 0
    %447 = vmatpush1.bf16.msra.mxu0 0
    %448 = vmatprep.subr.bf16.mxu0 0
    %449 = vmatpush1.bf16.msra.mxu0 0
    %450 = vmatprep.subr.bf16.mxu0 0
    %451 = vmatpush1.bf16.msra.mxu0 0
    %452 = vmatprep.mubr.bf16.mxu0 0
    %453 = vmatmul.mubr.bf16.gmra.mrb[0].mxu0 %v280
    %v454 = vpop.f32.mrb[0].mxu0
    %v455 = vadd.f32 %v367, %v454
    %v456 = vpop.f32.mrb[0].mxu0
    %v457 = vpop.f32.mrb[0].mxu0
    %v458 = vpop.f32.mrb[0].mxu0
    %459 = vdwg.mxu0
    %v460 = vld [vmem:[%s7] sm:$0x1]
    %v462 = vlaneseq
    %v463 = vshrl.u32 %v462, 7
    %v464 = vsub.s32 0, %v463
    %v465 = vrot.slane %v460, %v464
    %v467 = vadd.f32 %v455, %v465
    %v468 = vmax.f32 %v467, 0.0
    %v469 = vpack.c.bf16 %v468, %v468
    %v470 = vld [vmem:[%s8] sm:$0xf]
    %v471 = vld [vmem:[%s8 + $0x4] sm:$0xf]
    %v472 = vld [vmem:[%s8 + $0x8] sm:$0xf]
    %v473 = vld [vmem:[%s8 + $0xc] sm:$0xf]
    %v474 = vld [vmem:[%s8 + $0x10] sm:$0xf]
    %v475 = vld [vmem:[%s8 + $0x14] sm:$0xf]
    %v476 = vld [vmem:[%s8 + $0x18] sm:$0xf]
    %v477 = vld [vmem:[%s8 + $0x1c] sm:$0xf]
    %v478 = vld [vmem:[%s8 + $0x20] sm:$0xf]
    %v479 = vld [vmem:[%s8 + $0x24] sm:$0xf]
    %v480 = vld [vmem:[%s9] sm:$0x1]
    %v482 = vlaneseq
    %v483 = vshrl.u32 %v482, 7
    %v484 = vsub.s32 0, %v483
    %v485 = vrot.slane %v480, %v484
    %v497 = vunpack.c.l.b16 %v470
    %v498 = vunpack.c.l.b16 %v471
    %v499 = vunpack.c.l.b16 %v472
    %v500 = vunpack.c.l.b16 %v473
    %v501 = vunpack.c.l.b16 %v474
    %v502 = vunpack.c.l.b16 %v475
    %v503 = vunpack.c.l.b16 %v476
    %v504 = vunpack.c.l.b16 %v477
    %v505 = vunpack.c.l.b16 %v478
    %v506 = vunpack.c.l.b16 %v479
    %v507 = vpack.c.b16 %v498, %v497
    %v508 = vpack.c.b16 %v500, %v499
    %v509 = vpack.c.b16 %v502, %v501
    %v510 = vpack.c.b16 %v504, %v503
    %v511 = vpack.c.b16 %v506, %v505
    %vm517 = vcmask 654336
    %v519 = vsel %vm517, %v469, 0
    %521 = vmatprep.subr.bf16.mxu0 0
    %522 = vmatpush1.bf16.msra.mxu0 %v507
    %523 = vmatprep.subr.bf16.mxu0 0
    %524 = vmatpush1.bf16.msra.mxu0 %v508
    %525 = vmatprep.subr.bf16.mxu0 0
    %526 = vmatpush1.bf16.msra.mxu0 %v509
    %527 = vmatprep.subr.bf16.mxu0 0
    %528 = vmatpush1.bf16.msra.mxu0 %v510
    %529 = vmatprep.subr.bf16.mxu0 0
    %530 = vmatpush1.bf16.msra.mxu0 %v511
    %531 = vmatprep.subr.bf16.mxu0 0
    %532 = vmatpush1.bf16.msra.mxu0 0
    %533 = vmatprep.subr.bf16.mxu0 0
    %534 = vmatpush1.bf16.msra.mxu0 0
    %535 = vmatprep.subr.bf16.mxu0 0
    %536 = vmatpush1.bf16.msra.mxu0 0
    %537 = vmatprep.subr.bf16.mxu0 0
    %538 = vmatpush1.bf16.msra.mxu0 0
    %539 = vmatprep.subr.bf16.mxu0 0
    %540 = vmatpush1.bf16.msra.mxu0 0
    %541 = vmatprep.subr.bf16.mxu0 0
    %542 = vmatpush1.bf16.msra.mxu0 0
    %543 = vmatprep.subr.bf16.mxu0 0
    %544 = vmatpush1.bf16.msra.mxu0 0
    %545 = vmatprep.subr.bf16.mxu0 0
    %546 = vmatpush1.bf16.msra.mxu0 0
    %547 = vmatprep.subr.bf16.mxu0 0
    %548 = vmatpush1.bf16.msra.mxu0 0
    %549 = vmatprep.subr.bf16.mxu0 0
    %550 = vmatpush1.bf16.msra.mxu0 0
    %551 = vmatprep.subr.bf16.mxu0 0
    %552 = vmatpush1.bf16.msra.mxu0 0
    %553 = vmatprep.mubr.bf16.mxu0 0
    %554 = vmatmul.mubr.bf16.gmra.mrb[0].mxu0 %v519
    %v555 = vpop.f32.mrb[0].mxu0
    %v556 = vadd.f32 %v485, %v555
    %v557 = vpop.f32.mrb[0].mxu0
    %v558 = vpop.f32.mrb[0].mxu0
    %v559 = vpop.f32.mrb[0].mxu0
    %560 = vdwg.mxu0
    %v561 = vmax.f32 %v556, 0.0
    %v562 = vpack.c.bf16 %v561, %v561
    %v563 = vld [vmem:[%s10] sm:$0xf]
    %v564 = vld [vmem:[%s10 + $0x4] sm:$0xf]
    %v565 = vld [vmem:[%s10 + $0x8] sm:$0xf]
    %v566 = vld [vmem:[%s10 + $0xc] sm:$0x7]
    %v567 = vld [vmem:[%s11] sm:$0x1]
    %v569 = vlaneseq
    %v570 = vshrl.u32 %v569, 7
    %v571 = vsub.s32 0, %v570
    %v572 = vrot.slane %v567, %v571
    %v578 = vunpack.c.l.b16 %v563
    %v579 = vunpack.c.l.b16 %v564
    %v580 = vunpack.c.l.b16 %v565
    %v581 = vunpack.c.l.b16 %v566
    %v582 = vpack.c.b16 %v579, %v578
    %v583 = vpack.c.b16 %v581, %v580
    %vm585 = vcmask 244736
    %v587 = vsel %vm585, %v562, 0
    %v590 = vsel %vm326, %v583, 0
    %592 = vmatprep.subr.bf16.mxu0 0
    %593 = vmatpush1.bf16.msra.mxu0 %v582
    %594 = vmatprep.subr.bf16.mxu0 0
    %595 = vmatpush1.bf16.msra.mxu0 %v590
    %596 = vmatprep.subr.bf16.mxu0 0
    %597 = vmatpush1.bf16.msra.mxu0 0
    %598 = vmatprep.subr.bf16.mxu0 0
    %599 = vmatpush1.bf16.msra.mxu0 0
    %600 = vmatprep.subr.bf16.mxu0 0
    %601 = vmatpush1.bf16.msra.mxu0 0
    %602 = vmatprep.subr.bf16.mxu0 0
    %603 = vmatpush1.bf16.msra.mxu0 0
    %604 = vmatprep.subr.bf16.mxu0 0
    %605 = vmatpush1.bf16.msra.mxu0 0
    %606 = vmatprep.subr.bf16.mxu0 0
    %607 = vmatpush1.bf16.msra.mxu0 0
    %608 = vmatprep.subr.bf16.mxu0 0
    %609 = vmatpush1.bf16.msra.mxu0 0
    %610 = vmatprep.subr.bf16.mxu0 0
    %611 = vmatpush1.bf16.msra.mxu0 0
    %612 = vmatprep.subr.bf16.mxu0 0
    %613 = vmatpush1.bf16.msra.mxu0 0
    %614 = vmatprep.subr.bf16.mxu0 0
    %615 = vmatpush1.bf16.msra.mxu0 0
    %616 = vmatprep.subr.bf16.mxu0 0
    %617 = vmatpush1.bf16.msra.mxu0 0
    %618 = vmatprep.subr.bf16.mxu0 0
    %619 = vmatpush1.bf16.msra.mxu0 0
    %620 = vmatprep.subr.bf16.mxu0 0
    %621 = vmatpush1.bf16.msra.mxu0 0
    %622 = vmatprep.subr.bf16.mxu0 0
    %623 = vmatpush1.bf16.msra.mxu0 0
    %624 = vmatprep.mubr.bf16.mxu0 0
    %625 = vmatmul.mubr.bf16.gmra.mrb[0].mxu0 %v587
    %v626 = vpop.f32.mrb[0].mxu0
    %v627 = vadd.f32 %v572, %v626
    %v628 = vpop.f32.mrb[0].mxu0
    %v629 = vpop.f32.mrb[0].mxu0
    %v630 = vpop.f32.mrb[0].mxu0
    %631 = vdwg.mxu0
    %632 = vst [vmem:[%s12] sm:$0xff] %v627
    // Predicated region
    $region54: #{qnet_forward.1} parent=1 // pred_check
      _
    $region55: #{qnet_forward.1} parent=1 // pred_check_branch
      %634 = sbr.rel (0) target = $region57
    $region56: #{qnet_forward.1} parent=1 // pred_region
      _
    $region57: #{qnet_forward.1} parent=1 // pred_fallthru
      _
    // Predicated region
    $region58: #{qnet_forward.1} parent=1 // pred_check
      _
    $region59: #{qnet_forward.1} parent=1 // pred_check_branch
      %636 = sbr.rel (0) target = $region61
    $region60: #{qnet_forward.1} parent=1 // pred_region
      _
    $region61: #{qnet_forward.1} parent=1 // pred_fallthru
      _
    %637 = vsyncpa [#allocation3], 1

</llo_original>
